<compile_context>
chip_gen: v7x
topology: tpu7x:2x2x1
jax: 0.10.0
libtpu: 0.0.40
codegen_flags: <defaults>
</compile_context>

<pallas_src>
import functools

import jax
import jax.numpy as jnp
from jax.experimental import pallas as pl
from jax.experimental.pallas import tpu as pltpu


def _round_up(v, m):
    return ((v + m - 1) // m) * m


def rnn_msg_agent_kernel(x_ref, h_ref,
                         w1_ref, b1_ref,
                         wi_rz_ref, wh_rz_ref, brz_ref,
                         win_ref, bin_ref,
                         whn_ref, bhn_ref,
                         out_ref):
    Hp = out_ref.shape[-1]

    x = x_ref[...]          # [T, Dp] f32 (padded lanes are zero)
    h = h_ref[...]          # [T, Hp] f32 (padded lanes are zero)

    # fc1 + relu (bf16 operands, f32 accumulation on the MXU)
    x1 = jnp.dot(x.astype(jnp.bfloat16), w1_ref[...],
                 preferred_element_type=jnp.float32) + b1_ref[...]
    x1 = jnp.maximum(x1, 0.0)

    x1b = x1.astype(jnp.bfloat16)
    hb = h.astype(jnp.bfloat16)

    # Fused r/z gate pre-activations:
    #   cols [0:Hp) -> r gate, cols [Hp:2Hp) -> z gate  (lane-aligned slices)
    g_rz = (jnp.dot(x1b, wi_rz_ref[...], preferred_element_type=jnp.float32)
            + jnp.dot(hb, wh_rz_ref[...], preferred_element_type=jnp.float32)
            + brz_ref[...])
    r = jax.nn.sigmoid(g_rz[:, :Hp])
    z = jax.nn.sigmoid(g_rz[:, Hp:])

    # n gate: tanh(W_in x1 + b_in + r * (W_hn h + b_hn))
    gx_n = jnp.dot(x1b, win_ref[...],
                   preferred_element_type=jnp.float32) + bin_ref[...]
    gh_n = jnp.dot(hb, whn_ref[...],
                   preferred_element_type=jnp.float32) + bhn_ref[...]
    n = jnp.tanh(gx_n + r * gh_n)

    # (1 - z) * n + z * h  ==  n + z * (h - n)
    out_ref[...] = n + z * (h - n)


def init_params(key, input_dim, hidden_dim):
    """Deterministic synthetic parameters matching nn.Linear / nn.GRUCell shapes,
    pre-transposed to [in, out]. Biases kept as [1, out]. (Logical, f32.)"""
    ks = jax.random.split(key, 6)

    def u(k, shape, fan_in):
        bound = 1.0 / jnp.sqrt(fan_in)
        return jax.random.uniform(k, shape, jnp.float32, -bound, bound)

    return {
        # fc1: Linear(input_dim, H)
        "w1": u(ks[0], (input_dim, hidden_dim), input_dim),
        "b1": u(ks[1], (1, hidden_dim), input_dim),
        # GRUCell(H, H): weight_ih [3H, H] -> transposed [H, 3H]; same for hh
        "w_ih": u(ks[2], (hidden_dim, 3 * hidden_dim), hidden_dim),
        "b_ih": u(ks[3], (1, 3 * hidden_dim), hidden_dim),
        "w_hh": u(ks[4], (hidden_dim, 3 * hidden_dim), hidden_dim),
        "b_hh": u(ks[5], (1, 3 * hidden_dim), hidden_dim),
    }


def pack_params(params, input_dim, hidden_dim):
    """Zero-pad logical params to 128-lane tiles, fuse the r/z gate weights
    column-wise (r in cols [0:Hp), z in cols [Hp:2Hp)), and cast weights to
    bf16 (biases stay f32)."""
    H = hidden_dim
    Dp = _round_up(input_dim, 128)
    Hp = _round_up(H, 128)
    f32, bf16 = jnp.float32, jnp.bfloat16

    w1 = jnp.zeros((Dp, Hp), f32).at[:input_dim, :H].set(params["w1"])
    b1 = jnp.zeros((1, Hp), f32).at[:, :H].set(params["b1"])

    w_ih, b_ih = params["w_ih"], params["b_ih"]   # [H, 3H], [1, 3H]
    w_hh, b_hh = params["w_hh"], params["b_hh"]

    # r/z gate weights, ih and hh paths kept separate (no concat in-kernel).
    w_ih_rz = jnp.zeros((Hp, 2 * Hp), f32)
    w_ih_rz = w_ih_rz.at[:H, :H].set(w_ih[:, 0:H])
    w_ih_rz = w_ih_rz.at[:H, Hp:Hp + H].set(w_ih[:, H:2 * H])
    w_hh_rz = jnp.zeros((Hp, 2 * Hp), f32)
    w_hh_rz = w_hh_rz.at[:H, :H].set(w_hh[:, 0:H])
    w_hh_rz = w_hh_rz.at[:H, Hp:Hp + H].set(w_hh[:, H:2 * H])
    b_rz = jnp.zeros((1, 2 * Hp), f32)
    b_rz = b_rz.at[:, :H].set(b_ih[:, 0:H] + b_hh[:, 0:H])
    b_rz = b_rz.at[:, Hp:Hp + H].set(b_ih[:, H:2 * H] + b_hh[:, H:2 * H])

    w_in = jnp.zeros((Hp, Hp), f32).at[:H, :H].set(w_ih[:, 2 * H:])
    b_in = jnp.zeros((1, Hp), f32).at[:, :H].set(b_ih[:, 2 * H:])
    w_hn = jnp.zeros((Hp, Hp), f32).at[:H, :H].set(w_hh[:, 2 * H:])
    b_hn = jnp.zeros((1, Hp), f32).at[:, :H].set(b_hh[:, 2 * H:])

    return {
        "w1": w1.astype(bf16), "b1": b1,
        "w_ih_rz": w_ih_rz.astype(bf16), "w_hh_rz": w_hh_rz.astype(bf16),
        "b_rz": b_rz,
        "w_in": w_in.astype(bf16), "b_in": b_in,
        "w_hn": w_hn.astype(bf16), "b_hn": b_hn,
    }


@functools.partial(jax.jit, static_argnames=("tile_n",))
def rnn_msg_agent_forward(x, hidden, packed, *, tile_n=512):
    """x: [batch*n_agents, input_dim]  hidden: [batch, n_agents, H]
       -> h_out: [batch, n_agents, H]"""
    batch, n_agents, H = hidden.shape
    N, D = x.shape
    assert N == batch * n_agents

    Dp, Hp = packed["w1"].shape

    tile = min(tile_n, _round_up(N, 8))     # rows per grid step (multiple of 8)
    Np = _round_up(N, tile)

    # Zero-pad rows and lanes (padding contributes nothing and is sliced off).
    x_pad = jnp.zeros((Np, Dp), jnp.float32).at[:N, :D].set(x)
    h_pad = jnp.zeros((Np, Hp), jnp.float32).at[:N, :H].set(hidden.reshape(N, H))

    def row_spec(cols):
        return pl.BlockSpec((tile, cols), lambda i: (i, 0))

    def full_spec(arr):
        return pl.BlockSpec(arr.shape, lambda i: (0, 0))

    weights = (packed["w1"], packed["b1"],
               packed["w_ih_rz"], packed["w_hh_rz"], packed["b_rz"],
               packed["w_in"], packed["b_in"],
               packed["w_hn"], packed["b_hn"])

    flops = 2 * Np * (Dp * Hp + 6 * Hp * Hp)
    bytes_accessed = (x_pad.size + h_pad.size + Np * Hp) * 4 + sum(
        int(w.size) * w.dtype.itemsize for w in weights)

    h_out = pl.pallas_call(
        rnn_msg_agent_kernel,
        out_shape=jax.ShapeDtypeStruct((Np, Hp), jnp.float32),
        grid=(Np // tile,),
        in_specs=[row_spec(Dp), row_spec(Hp)] + [full_spec(w) for w in weights],
        out_specs=row_spec(Hp),
        compiler_params=pltpu.CompilerParams(
            dimension_semantics=("parallel",)),
        cost_estimate=pl.CostEstimate(
            flops=int(flops),
            transcendentals=int(3 * Np * Hp),
            bytes_accessed=int(bytes_accessed)),
    )(x_pad, h_pad, *weights)

    return h_out[:N, :H].reshape(batch, n_agents, H)


def reference_forward(x, hidden, params):
    """Pure-JAX (f32) reference of the PyTorch forward."""
    batch, n_agents, H = hidden.shape
    h = hidden.reshape(-1, H)
    x1 = jnp.maximum(x @ params["w1"] + params["b1"], 0.0)
    gx = x1 @ params["w_ih"] + params["b_ih"]
    gh = h @ params["w_hh"] + params["b_hh"]
    r = jax.nn.sigmoid(gx[:, :H] + gh[:, :H])
    z = jax.nn.sigmoid(gx[:, H:2 * H] + gh[:, H:2 * H])
    n = jnp.tanh(gx[:, 2 * H:] + r * gh[:, 2 * H:])
    h_out = (1.0 - z) * n + z * h
    return h_out.reshape(batch, n_agents, H)


if __name__ == "__main__":
    # Small shapes consistent with the module's forward:
    #   x: [batch*n_agents, input_dim], hidden: [batch, n_agents, rnn_hidden_dim]
    batch, n_agents = 2, 3
    input_dim, hidden_dim = 16, 32

    key = jax.random.PRNGKey(0)
    k_x, k_h, k_p, k_x2, k_h2 = jax.random.split(key, 5)

    params = init_params(k_p, input_dim, hidden_dim)
    packed = pack_params(params, input_dim, hidden_dim)

    x = jax.random.normal(k_x, (batch * n_agents, input_dim), jnp.float32)
    hidden = jax.random.normal(k_h, (batch, n_agents, hidden_dim), jnp.float32)

    h_out = jax.block_until_ready(rnn_msg_agent_forward(x, hidden, packed))
    h_ref = reference_forward(x, hidden, params)
    assert h_out.shape == (batch, n_agents, hidden_dim)
    # bf16 matmul operands -> looser tolerance than the f32 reference.
    assert jnp.allclose(h_out, h_ref, atol=3e-2, rtol=3e-2), \
        float(jnp.max(jnp.abs(h_out - h_ref)))

    # Larger batch: exercises the multi-step row grid and row padding
    # (N = 650 -> two 512-row tiles, rows 650..1023 zero-padded).
    batch2, n_agents2 = 130, 5
    x2 = jax.random.normal(k_x2, (batch2 * n_agents2, input_dim), jnp.float32)
    hidden2 = jax.random.normal(k_h2, (batch2, n_agents2, hidden_dim), jnp.float32)
    h_out2 = jax.block_until_ready(rnn_msg_agent_forward(x2, hidden2, packed))
    h_ref2 = reference_forward(x2, hidden2, params)
    assert jnp.allclose(h_out2, h_ref2, atol=3e-2, rtol=3e-2), \
        float(jnp.max(jnp.abs(h_out2 - h_ref2)))

    # TODO(synk): q_without_communication / communicate / aggregate /
    # combine_message / combine / belief_to_evidence are not part of forward()
    # and are not implemented as Pallas kernels here.
    print("KERNEL_OK")
</pallas_src>

<mosaic_0001>
module attributes {stable_mosaic.version = 11 : i64} {
  func.func @rnn_msg_agent_kernel(%arg0: i32, %arg1: memref<8x128xf32, #tpu.memory_space<vmem>>, %arg2: memref<8x128xf32, #tpu.memory_space<vmem>>, %arg3: memref<128x128xbf16, #tpu.memory_space<vmem>>, %arg4: memref<1x128xf32, #tpu.memory_space<vmem>>, %arg5: memref<128x256xbf16, #tpu.memory_space<vmem>>, %arg6: memref<128x256xbf16, #tpu.memory_space<vmem>>, %arg7: memref<1x256xf32, #tpu.memory_space<vmem>>, %arg8: memref<128x128xbf16, #tpu.memory_space<vmem>>, %arg9: memref<1x128xf32, #tpu.memory_space<vmem>>, %arg10: memref<128x128xbf16, #tpu.memory_space<vmem>>, %arg11: memref<1x128xf32, #tpu.memory_space<vmem>>, %arg12: memref<8x128xf32, #tpu.memory_space<vmem>>) attributes {dimension_semantics = [#tpu.dimension_semantics<parallel>], iteration_bounds = array<i64: 1>, scalar_prefetch = 0 : i64, scratch_operands = 0 : i64, tpu.core_type = #tpu.core_type<tc>, window_params = [{transform_indices = @transform_0, window_bounds = array<i64: 8, 128>}, {transform_indices = @transform_1, window_bounds = array<i64: 8, 128>}, {pipeline_mode = #tpu.pipeline_mode<synchronous>, transform_indices = @transform_2, window_bounds = array<i64: 128, 128>}, {pipeline_mode = #tpu.pipeline_mode<synchronous>, transform_indices = @transform_3, window_bounds = array<i64: 1, 128>}, {pipeline_mode = #tpu.pipeline_mode<synchronous>, transform_indices = @transform_4, window_bounds = array<i64: 128, 256>}, {pipeline_mode = #tpu.pipeline_mode<synchronous>, transform_indices = @transform_5, window_bounds = array<i64: 128, 256>}, {pipeline_mode = #tpu.pipeline_mode<synchronous>, transform_indices = @transform_6, window_bounds = array<i64: 1, 256>}, {pipeline_mode = #tpu.pipeline_mode<synchronous>, transform_indices = @transform_7, window_bounds = array<i64: 128, 128>}, {pipeline_mode = #tpu.pipeline_mode<synchronous>, transform_indices = @transform_8, window_bounds = array<i64: 1, 128>}, {pipeline_mode = #tpu.pipeline_mode<synchronous>, transform_indices = @transform_9, window_bounds = array<i64: 128, 128>}, {pipeline_mode = #tpu.pipeline_mode<synchronous>, transform_indices = @transform_10, window_bounds = array<i64: 1, 128>}, {transform_indices = @transform_11, window_bounds = array<i64: 8, 128>}]} {
    %c0 = arith.constant 0 : index
    %c0_0 = arith.constant 0 : index
    %0 = vector.load %arg1[%c0, %c0_0] : memref<8x128xf32, #tpu.memory_space<vmem>>, vector<8x128xf32>
    %c0_1 = arith.constant 0 : index
    %c0_2 = arith.constant 0 : index
    %1 = vector.load %arg2[%c0_1, %c0_2] : memref<8x128xf32, #tpu.memory_space<vmem>>, vector<8x128xf32>
    %2 = arith.truncf %0 : vector<8x128xf32> to vector<8x128xbf16>
    %c0_3 = arith.constant 0 : index
    %c0_4 = arith.constant 0 : index
    %3 = vector.load %arg3[%c0_3, %c0_4] : memref<128x128xbf16, #tpu.memory_space<vmem>>, vector<128x128xbf16>
    %cst = arith.constant dense<0.000000e+00> : vector<8x128xf32>
    %4 = tpu.matmul %2, %3, %cst {dimension_numbers = #tpu.dot_dimension_numbers<[1], [0], [0], [1], [0, 0, 1, 1], [], []>} : vector<8x128xbf16>, vector<128x128xbf16>, vector<8x128xf32> -> vector<8x128xf32>
    %c0_5 = arith.constant 0 : index
    %c0_6 = arith.constant 0 : index
    %5 = vector.load %arg4[%c0_5, %c0_6] : memref<1x128xf32, #tpu.memory_space<vmem>>, vector<1x128xf32>
    %6 = vector.broadcast %5 : vector<1x128xf32> to vector<8x128xf32>
    %7 = arith.addf %4, %6 : vector<8x128xf32>
    %cst_7 = arith.constant 0.000000e+00 : f32
    %8 = vector.broadcast %cst_7 : f32 to vector<8x128xf32>
    %9 = arith.maximumf %7, %8 : vector<8x128xf32>
    %10 = arith.truncf %9 : vector<8x128xf32> to vector<8x128xbf16>
    %11 = arith.truncf %1 : vector<8x128xf32> to vector<8x128xbf16>
    %c0_8 = arith.constant 0 : index
    %c0_9 = arith.constant 0 : index
    %12 = vector.load %arg5[%c0_8, %c0_9] : memref<128x256xbf16, #tpu.memory_space<vmem>>, vector<128x256xbf16>
    %cst_10 = arith.constant dense<0.000000e+00> : vector<8x256xf32>
    %13 = tpu.matmul %10, %12, %cst_10 {dimension_numbers = #tpu.dot_dimension_numbers<[1], [0], [0], [1], [0, 0, 1, 1], [], []>} : vector<8x128xbf16>, vector<128x256xbf16>, vector<8x256xf32> -> vector<8x256xf32>
    %c0_11 = arith.constant 0 : index
    %c0_12 = arith.constant 0 : index
    %14 = vector.load %arg6[%c0_11, %c0_12] : memref<128x256xbf16, #tpu.memory_space<vmem>>, vector<128x256xbf16>
    %cst_13 = arith.constant dense<0.000000e+00> : vector<8x256xf32>
    %15 = tpu.matmul %11, %14, %cst_13 {dimension_numbers = #tpu.dot_dimension_numbers<[1], [0], [0], [1], [0, 0, 1, 1], [], []>} : vector<8x128xbf16>, vector<128x256xbf16>, vector<8x256xf32> -> vector<8x256xf32>
    %16 = arith.addf %13, %15 : vector<8x256xf32>
    %c0_14 = arith.constant 0 : index
    %c0_15 = arith.constant 0 : index
    %17 = vector.load %arg7[%c0_14, %c0_15] : memref<1x256xf32, #tpu.memory_space<vmem>>, vector<1x256xf32>
    %18 = vector.broadcast %17 : vector<1x256xf32> to vector<8x256xf32>
    %19 = arith.addf %16, %18 : vector<8x256xf32>
    %20 = vector.extract_strided_slice %19 {offsets = [0, 0], sizes = [8, 128], strides = [1, 1]} : vector<8x256xf32> to vector<8x128xf32>
    %21 = arith.negf %20 : vector<8x128xf32>
    %22 = math.exp %21 : vector<8x128xf32>
    %cst_16 = arith.constant 1.000000e+00 : f32
    %23 = vector.broadcast %cst_16 : f32 to vector<8x128xf32>
    %24 = arith.addf %23, %22 : vector<8x128xf32>
    %25 = arith.divf %23, %24 : vector<8x128xf32>
    %26 = vector.extract_strided_slice %19 {offsets = [0, 128], sizes = [8, 128], strides = [1, 1]} : vector<8x256xf32> to vector<8x128xf32>
    %27 = arith.negf %26 : vector<8x128xf32>
    %28 = math.exp %27 : vector<8x128xf32>
    %cst_17 = arith.constant 1.000000e+00 : f32
    %29 = vector.broadcast %cst_17 : f32 to vector<8x128xf32>
    %30 = arith.addf %29, %28 : vector<8x128xf32>
    %31 = arith.divf %29, %30 : vector<8x128xf32>
    %c0_18 = arith.constant 0 : index
    %c0_19 = arith.constant 0 : index
    %32 = vector.load %arg8[%c0_18, %c0_19] : memref<128x128xbf16, #tpu.memory_space<vmem>>, vector<128x128xbf16>
    %cst_20 = arith.constant dense<0.000000e+00> : vector<8x128xf32>
    %33 = tpu.matmul %10, %32, %cst_20 {dimension_numbers = #tpu.dot_dimension_numbers<[1], [0], [0], [1], [0, 0, 1, 1], [], []>} : vector<8x128xbf16>, vector<128x128xbf16>, vector<8x128xf32> -> vector<8x128xf32>
    %c0_21 = arith.constant 0 : index
    %c0_22 = arith.constant 0 : index
    %34 = vector.load %arg9[%c0_21, %c0_22] : memref<1x128xf32, #tpu.memory_space<vmem>>, vector<1x128xf32>
    %35 = vector.broadcast %34 : vector<1x128xf32> to vector<8x128xf32>
    %36 = arith.addf %33, %35 : vector<8x128xf32>
    %c0_23 = arith.constant 0 : index
    %c0_24 = arith.constant 0 : index
    %37 = vector.load %arg10[%c0_23, %c0_24] : memref<128x128xbf16, #tpu.memory_space<vmem>>, vector<128x128xbf16>
    %cst_25 = arith.constant dense<0.000000e+00> : vector<8x128xf32>
    %38 = tpu.matmul %11, %37, %cst_25 {dimension_numbers = #tpu.dot_dimension_numbers<[1], [0], [0], [1], [0, 0, 1, 1], [], []>} : vector<8x128xbf16>, vector<128x128xbf16>, vector<8x128xf32> -> vector<8x128xf32>
    %c0_26 = arith.constant 0 : index
    %c0_27 = arith.constant 0 : index
    %39 = vector.load %arg11[%c0_26, %c0_27] : memref<1x128xf32, #tpu.memory_space<vmem>>, vector<1x128xf32>
    %40 = vector.broadcast %39 : vector<1x128xf32> to vector<8x128xf32>
    %41 = arith.addf %38, %40 : vector<8x128xf32>
    %42 = arith.mulf %25, %41 : vector<8x128xf32>
    %43 = arith.addf %36, %42 : vector<8x128xf32>
    %44 = math.tanh %43 : vector<8x128xf32>
    %45 = arith.subf %1, %44 : vector<8x128xf32>
    %46 = arith.mulf %31, %45 : vector<8x128xf32>
    %47 = arith.addf %44, %46 : vector<8x128xf32>
    %c0_28 = arith.constant 0 : index
    %c0_29 = arith.constant 0 : index
    %48 = vector.load %arg12[%c0_28, %c0_29] : memref<8x128xf32, #tpu.memory_space<vmem>>, vector<8x128xf32>
    tpu.vector_store %arg12[%c0_28, %c0_29], %47 {strides = array<i32>} : memref<8x128xf32, #tpu.memory_space<vmem>>, vector<8x128xf32>,
    return
  }
  func.func @transform_0(%arg0: i32) -> (i32, i32) {
    %c0_i32 = arith.constant 0 : i32
    %c0_i32_0 = arith.constant 0 : i32
    return %arg0, %c0_i32 : i32, i32
  }
  func.func @transform_1(%arg0: i32) -> (i32, i32) {
    %c0_i32 = arith.constant 0 : i32
    %c0_i32_0 = arith.constant 0 : i32
    return %arg0, %c0_i32 : i32, i32
  }
  func.func @transform_2(%arg0: i32) -> (i32, i32) {
    %c0_i32 = arith.constant 0 : i32
    %c0_i32_0 = arith.constant 0 : i32
    %c0_i32_1 = arith.constant 0 : i32
    return %c0_i32, %c0_i32_0 : i32, i32
  }
  func.func @transform_3(%arg0: i32) -> (i32, i32) {
    %c0_i32 = arith.constant 0 : i32
    %c0_i32_0 = arith.constant 0 : i32
    %c0_i32_1 = arith.constant 0 : i32
    return %c0_i32, %c0_i32_0 : i32, i32
  }
  func.func @transform_4(%arg0: i32) -> (i32, i32) {
    %c0_i32 = arith.constant 0 : i32
    %c0_i32_0 = arith.constant 0 : i32
    %c0_i32_1 = arith.constant 0 : i32
    return %c0_i32, %c0_i32_0 : i32, i32
  }
  func.func @transform_5(%arg0: i32) -> (i32, i32) {
    %c0_i32 = arith.constant 0 : i32
    %c0_i32_0 = arith.constant 0 : i32
    %c0_i32_1 = arith.constant 0 : i32
    return %c0_i32, %c0_i32_0 : i32, i32
  }
  func.func @transform_6(%arg0: i32) -> (i32, i32) {
    %c0_i32 = arith.constant 0 : i32
    %c0_i32_0 = arith.constant 0 : i32
    %c0_i32_1 = arith.constant 0 : i32
    return %c0_i32, %c0_i32_0 : i32, i32
  }
  func.func @transform_7(%arg0: i32) -> (i32, i32) {
    %c0_i32 = arith.constant 0 : i32
    %c0_i32_0 = arith.constant 0 : i32
    %c0_i32_1 = arith.constant 0 : i32
    return %c0_i32, %c0_i32_0 : i32, i32
  }
  func.func @transform_8(%arg0: i32) -> (i32, i32) {
    %c0_i32 = arith.constant 0 : i32
    %c0_i32_0 = arith.constant 0 : i32
    %c0_i32_1 = arith.constant 0 : i32
    return %c0_i32, %c0_i32_0 : i32, i32
  }
  func.func @transform_9(%arg0: i32) -> (i32, i32) {
    %c0_i32 = arith.constant 0 : i32
    %c0_i32_0 = arith.constant 0 : i32
    %c0_i32_1 = arith.constant 0 : i32
    return %c0_i32, %c0_i32_0 : i32, i32
  }
  func.func @transform_10(%arg0: i32) -> (i32, i32) {
    %c0_i32 = arith.constant 0 : i32
    %c0_i32_0 = arith.constant 0 : i32
    %c0_i32_1 = arith.constant 0 : i32
    return %c0_i32, %c0_i32_0 : i32, i32
  }
  func.func @transform_11(%arg0: i32) -> (i32, i32) {
    %c0_i32 = arith.constant 0 : i32
    %c0_i32_0 = arith.constant 0 : i32
    return %arg0, %c0_i32 : i32, i32
  }
}

</mosaic_0001>

<llo_original>
// kernel: rnn_msg_agent_forward.1
$region0: #{rnn_msg_agent_forward.1}
  #allocation0 [shape = 'u32[]', space=smem, size = 0x4, offset = 0x4, fixed_abs, tag = 'smem constant byte address 0x4 - core index']
  #allocation1 [shape = 'u32[144,128]{1,0:T(1,128)}', space=vmem, size = 0x12000, scoped, tag = 'internal scratch']
  %s0 = inlined_call_operand.vmem [shape: f32[8,128], index: 0, kind: input, shape index: {}]
  %s1 = inlined_call_operand.vmem [shape: f32[8,128], index: 1, kind: input, shape index: {}]
  %s2 = inlined_call_operand.vmem [shape: bf16[128,128], index: 2, kind: input, shape index: {}]
  %s3 = inlined_call_operand.vmem [shape: f32[1,128], index: 3, kind: input, shape index: {}]
  %s4 = inlined_call_operand.hbm [shape: bf16[128,256], index: 4, kind: input, shape index: {}]
  %s5 = inlined_call_operand.hbm [shape: bf16[128,256], index: 5, kind: input, shape index: {}]
  %s6 = inlined_call_operand.vmem [shape: f32[1,256], index: 6, kind: input, shape index: {}]
  %s7 = inlined_call_operand.hbm [shape: bf16[128,128], index: 7, kind: input, shape index: {}]
  %s8 = inlined_call_operand.vmem [shape: f32[1,128], index: 8, kind: input, shape index: {}]
  %s9 = inlined_call_operand.hbm [shape: bf16[128,128], index: 9, kind: input, shape index: {}]
  %s10 = inlined_call_operand.vmem [shape: f32[1,128], index: 10, kind: input, shape index: {}]
  %s11 = inlined_call_operand.vmem [shape: f32[8,128], index: 11, kind: output, shape index: {}]
  %s12 = sld [smem:[#allocation0]]
  $region70: #{rnn_msg_agent_forward.1} parent=0
    _
  %s14 = ssub.s32 1, %s12
  %s15 = scalar_select 0, %s14, %s12
  $region1: #{rnn_msg_agent_forward.1} parent=0
    #allocation2 [shape = 'u8[65536]{0}', space=vmem, size = 0x10000, scoped, tag = 'input window, operand 4, single buffered']
    #allocation3 [shape = 's32[1]{0}', space=sflag, size = 0x4, scoped, tag = 'scoped memory for rnn_msg_agent_forward.1']
    #allocation4 [shape = 'u8[65536]{0}', space=vmem, size = 0x10000, scoped, tag = 'input window, operand 5, single buffered']
    #allocation5 [shape = 's32[1]{0}', space=sflag, size = 0x4, scoped, tag = 'scoped memory for rnn_msg_agent_forward.1']
    #allocation6 [shape = 'u8[32768]{0}', space=vmem, size = 0x8000, scoped, tag = 'input window, operand 7, single buffered']
    #allocation7 [shape = 'u8[32768]{0}', space=vmem, size = 0x8000, scoped, tag = 'input window, operand 9, single buffered']
    #allocation8 [shape = 's32[1]{0}', space=sflag, size = 0x4, scoped, tag = 'scoped memory for rnn_msg_agent_forward.1']
    %16 = vsyncpa [#allocation3], 0
    %17 = vsyncpa [#allocation5], 0
    %18 = vsyncpa [#allocation8], 0
    // Predicated region
    $region2: #{rnn_msg_agent_forward.1} parent=1 // pred_check
      _
    $region3: #{rnn_msg_agent_forward.1} parent=1 // pred_check_branch
      %20 = sbr.rel (0) target = $region5
    $region4: #{rnn_msg_agent_forward.1} parent=1 // pred_region
      _
    $region5: #{rnn_msg_agent_forward.1} parent=1 // pred_fallthru
      _
    // Predicated region
    $region6: #{rnn_msg_agent_forward.1} parent=1 // pred_check
      _
    $region7: #{rnn_msg_agent_forward.1} parent=1 // pred_check_branch
      %22 = sbr.rel (0) target = $region9
    $region8: #{rnn_msg_agent_forward.1} parent=1 // pred_region
      _
    $region9: #{rnn_msg_agent_forward.1} parent=1 // pred_fallthru
      _
    // Predicated region
    $region10: #{rnn_msg_agent_forward.1} parent=1 // pred_check
      _
    $region11: #{rnn_msg_agent_forward.1} parent=1 // pred_check_branch
      %24 = sbr.rel (0) target = $region13
    $region12: #{rnn_msg_agent_forward.1} parent=1 // pred_region
      _
    $region13: #{rnn_msg_agent_forward.1} parent=1 // pred_fallthru
      _
    // Predicated region
    $region14: #{rnn_msg_agent_forward.1} parent=1 // pred_check
      _
    $region15: #{rnn_msg_agent_forward.1} parent=1 // pred_check_branch
      %26 = sbr.rel (0) target = $region17
    $region16: #{rnn_msg_agent_forward.1} parent=1 // pred_region
      _
    $region17: #{rnn_msg_agent_forward.1} parent=1 // pred_fallthru
      _
    // Predicated region
    $region18: #{rnn_msg_agent_forward.1} parent=1 // pred_check
      _
    $region19: #{rnn_msg_agent_forward.1} parent=1 // pred_check_branch
      %28 = sbr.rel (0) target = $region21
    $region20: #{rnn_msg_agent_forward.1} parent=1 // pred_region
      %s30 = ssub.s32 2048, 2048
      %31 = vsyncadd [#allocation3], %s30
      %s32 = sshll.u32 [#allocation2], 4
      %s33 = int_to_ptr.vmem [resolvable:$true] %s32
      %38 = dma.hbm_to_vmem [thread:$0]  %s4, 2048, %s33, [#allocation3], 128, 128, 8
    $region21: #{rnn_msg_agent_forward.1} parent=1 // pred_fallthru
      _
    // Predicated region
    $region22: #{rnn_msg_agent_forward.1} parent=1 // pred_check
      _
    $region23: #{rnn_msg_agent_forward.1} parent=1 // pred_check_branch
      %40 = sbr.rel (0) target = $region25
    $region24: #{rnn_msg_agent_forward.1} parent=1 // pred_region
      %s42 = ssub.s32 2048, 2048
      %43 = vsyncadd [#allocation5], %s42
      %s44 = sshll.u32 [#allocation4], 4
      %s45 = int_to_ptr.vmem [resolvable:$true] %s44
      %50 = dma.hbm_to_vmem [thread:$0]  %s5, 2048, %s45, [#allocation5], 128, 128, 8
    $region25: #{rnn_msg_agent_forward.1} parent=1 // pred_fallthru
      _
    // Predicated region
    $region26: #{rnn_msg_agent_forward.1} parent=1 // pred_check
      _
    $region27: #{rnn_msg_agent_forward.1} parent=1 // pred_check_branch
      %52 = sbr.rel (0) target = $region29
    $region28: #{rnn_msg_agent_forward.1} parent=1 // pred_region
      _
    $region29: #{rnn_msg_agent_forward.1} parent=1 // pred_fallthru
      _
    // Predicated region
    $region30: #{rnn_msg_agent_forward.1} parent=1 // pred_check
      _
    $region31: #{rnn_msg_agent_forward.1} parent=1 // pred_check_branch
      %54 = sbr.rel (0) target = $region33
    $region32: #{rnn_msg_agent_forward.1} parent=1 // pred_region
      %s56 = ssub.s32 1024, 1024
      %57 = vsyncadd [#allocation5], %s56
      %s58 = sshll.u32 [#allocation6], 4
      %s59 = int_to_ptr.vmem [resolvable:$true] %s58
      %64 = dma.hbm_to_vmem [thread:$0]  %s7, 1024, %s59, [#allocation5], 64, 64, 4
    $region33: #{rnn_msg_agent_forward.1} parent=1 // pred_fallthru
      _
    // Predicated region
    $region34: #{rnn_msg_agent_forward.1} parent=1 // pred_check
      _
    $region35: #{rnn_msg_agent_forward.1} parent=1 // pred_check_branch
      %66 = sbr.rel (0) target = $region37
    $region36: #{rnn_msg_agent_forward.1} parent=1 // pred_region
      _
    $region37: #{rnn_msg_agent_forward.1} parent=1 // pred_fallthru
      _
    // Predicated region
    $region38: #{rnn_msg_agent_forward.1} parent=1 // pred_check
      _
    $region39: #{rnn_msg_agent_forward.1} parent=1 // pred_check_branch
      %68 = sbr.rel (0) target = $region41
    $region40: #{rnn_msg_agent_forward.1} parent=1 // pred_region
      %s70 = ssub.s32 1024, 1024
      %71 = vsyncadd [#allocation8], %s70
      %s72 = sshll.u32 [#allocation7], 4
      %s73 = int_to_ptr.vmem [resolvable:$true] %s72
      %78 = dma.hbm_to_vmem [thread:$0]  %s9, 1024, %s73, [#allocation8], 64, 64, 4
    $region41: #{rnn_msg_agent_forward.1} parent=1 // pred_fallthru
      _
    // Predicated region
    $region42: #{rnn_msg_agent_forward.1} parent=1 // pred_check
      _
    $region43: #{rnn_msg_agent_forward.1} parent=1 // pred_check_branch
      %80 = sbr.rel (0) target = $region45
    $region44: #{rnn_msg_agent_forward.1} parent=1 // pred_region
      _
    $region45: #{rnn_msg_agent_forward.1} parent=1 // pred_fallthru
      _
    // Predicated region
    $region46: #{rnn_msg_agent_forward.1} parent=1 // pred_check
      _
    $region47: #{rnn_msg_agent_forward.1} parent=1 // pred_check_branch
      %82 = sbr.rel (0) target = $region49
    $region48: #{rnn_msg_agent_forward.1} parent=1 // pred_region
      %83 = dma.done [#allocation3], 2048
    $region49: #{rnn_msg_agent_forward.1} parent=1 // pred_fallthru
      _
    // Predicated region
    $region50: #{rnn_msg_agent_forward.1} parent=1 // pred_check
      _
    $region51: #{rnn_msg_agent_forward.1} parent=1 // pred_check_branch
      %85 = sbr.rel (0) target = $region53
    $region52: #{rnn_msg_agent_forward.1} parent=1 // pred_region
      %86 = dma.done [#allocation5], 2048
    $region53: #{rnn_msg_agent_forward.1} parent=1 // pred_fallthru
      _
    // Predicated region
    $region54: #{rnn_msg_agent_forward.1} parent=1 // pred_check
      _
    $region55: #{rnn_msg_agent_forward.1} parent=1 // pred_check_branch
      %88 = sbr.rel (0) target = $region57
    $region56: #{rnn_msg_agent_forward.1} parent=1 // pred_region
      %89 = dma.done [#allocation5], 1024
    $region57: #{rnn_msg_agent_forward.1} parent=1 // pred_fallthru
      _
    // Predicated region
    $region58: #{rnn_msg_agent_forward.1} parent=1 // pred_check
      _
    $region59: #{rnn_msg_agent_forward.1} parent=1 // pred_check_branch
      %91 = sbr.rel (0) target = $region61
    $region60: #{rnn_msg_agent_forward.1} parent=1 // pred_region
      %92 = dma.done [#allocation8], 1024
    $region61: #{rnn_msg_agent_forward.1} parent=1 // pred_fallthru
      _
    %v94 = vld [vmem:[%s0] sm:$0xff]
    %v95 = vld [vmem:[%s1] sm:$0xff]
    %v96 = vpack.c.bf16 %v94, %v94
    %v97 = vld [vmem:[%s2] sm:$0xf]
    %v98 = vld [vmem:[%s2 + $0x4] sm:$0xf]
    %v99 = vld [vmem:[%s2 + $0x8] sm:$0xf]
    %v100 = vld [vmem:[%s2 + $0xc] sm:$0xf]
    %v101 = vld [vmem:[%s2 + $0x10] sm:$0xf]
    %v102 = vld [vmem:[%s2 + $0x14] sm:$0xf]
    %v103 = vld [vmem:[%s2 + $0x18] sm:$0xf]
    %v104 = vld [vmem:[%s2 + $0x1c] sm:$0xf]
    %v105 = vld [vmem:[%s2 + $0x20] sm:$0xf]
    %v106 = vld [vmem:[%s2 + $0x24] sm:$0xf]
    %v107 = vld [vmem:[%s2 + $0x28] sm:$0xf]
    %v108 = vld [vmem:[%s2 + $0x2c] sm:$0xf]
    %v109 = vld [vmem:[%s2 + $0x30] sm:$0xf]
    %v110 = vld [vmem:[%s2 + $0x34] sm:$0xf]
    %v111 = vld [vmem:[%s2 + $0x38] sm:$0xf]
    %v112 = vld [vmem:[%s2 + $0x3c] sm:$0xf]
    %v113 = vld [vmem:[%s3] sm:$0x1]
    %v115 = vlaneseq
    %v116 = vshrl.u32 %v115, 7
    %v117 = vsub.s32 0, %v116
    %v118 = vrot.slane %v113, %v117
    %v136 = vunpack.c.l.b16 %v97
    %v137 = vunpack.c.l.b16 %v98
    %v138 = vunpack.c.l.b16 %v99
    %v139 = vunpack.c.l.b16 %v100
    %v140 = vunpack.c.l.b16 %v101
    %v141 = vunpack.c.l.b16 %v102
    %v142 = vunpack.c.l.b16 %v103
    %v143 = vunpack.c.l.b16 %v104
    %v144 = vunpack.c.l.b16 %v105
    %v145 = vunpack.c.l.b16 %v106
    %v146 = vunpack.c.l.b16 %v107
    %v147 = vunpack.c.l.b16 %v108
    %v148 = vunpack.c.l.b16 %v109
    %v149 = vunpack.c.l.b16 %v110
    %v150 = vunpack.c.l.b16 %v111
    %v151 = vunpack.c.l.b16 %v112
    %v152 = vpack.c.b16 %v137, %v136
    %v153 = vpack.c.b16 %v139, %v138
    %v154 = vpack.c.b16 %v141, %v140
    %v155 = vpack.c.b16 %v143, %v142
    %v156 = vpack.c.b16 %v145, %v144
    %v157 = vpack.c.b16 %v147, %v146
    %v158 = vpack.c.b16 %v149, %v148
    %v159 = vpack.c.b16 %v151, %v150
    %168 = vmatprep.subr.bf16.mxu0 0
    %169 = vmatpush1.bf16.msra.mxu0 %v152
    %170 = vmatprep.subr.bf16.mxu0 0
    %171 = vmatpush1.bf16.msra.mxu0 %v153
    %172 = vmatprep.subr.bf16.mxu0 0
    %173 = vmatpush1.bf16.msra.mxu0 %v154
    %174 = vmatprep.subr.bf16.mxu0 0
    %175 = vmatpush1.bf16.msra.mxu0 %v155
    %176 = vmatprep.subr.bf16.mxu0 0
    %177 = vmatpush1.bf16.msra.mxu0 %v156
    %178 = vmatprep.subr.bf16.mxu0 0
    %179 = vmatpush1.bf16.msra.mxu0 %v157
    %180 = vmatprep.subr.bf16.mxu0 0
    %181 = vmatpush1.bf16.msra.mxu0 %v158
    %182 = vmatprep.subr.bf16.mxu0 0
    %183 = vmatpush1.bf16.msra.mxu0 %v159
    %184 = vmatprep.subr.bf16.mxu0 0
    %185 = vmatpush1.bf16.msra.mxu0 0
    %186 = vmatprep.subr.bf16.mxu0 0
    %187 = vmatpush1.bf16.msra.mxu0 0
    %188 = vmatprep.subr.bf16.mxu0 0
    %189 = vmatpush1.bf16.msra.mxu0 0
    %190 = vmatprep.subr.bf16.mxu0 0
    %191 = vmatpush1.bf16.msra.mxu0 0
    %192 = vmatprep.subr.bf16.mxu0 0
    %193 = vmatpush1.bf16.msra.mxu0 0
    %194 = vmatprep.subr.bf16.mxu0 0
    %195 = vmatpush1.bf16.msra.mxu0 0
    %196 = vmatprep.subr.bf16.mxu0 0
    %197 = vmatpush1.bf16.msra.mxu0 0
    %198 = vmatprep.subr.bf16.mxu0 0
    %199 = vmatpush1.bf16.msra.mxu0 0
    %200 = vmatprep.mubr.bf16.mxu0 0
    %201 = vmatmul.mubr.bf16.gmra.mrb[0].mxu0 %v96
    %v202 = vpop.f32.mrb[0].mxu0
    %v203 = vadd.f32 %v118, %v202
    %v204 = vpop.f32.mrb[0].mxu0
    %v205 = vpop.f32.mrb[0].mxu0
    %v206 = vpop.f32.mrb[0].mxu0
    %207 = vdwg.mxu0
    %v208 = vmax.f32 %v203, 0.0
    %v209 = vpack.c.bf16 %v208, %v208
    %v210 = vpack.c.bf16 %v95, %v95
    %v211 = vld [vmem:[#allocation2] sm:$0xff]
    %v212 = vld [vmem:[#allocation2 + $0x8] sm:$0xff]
    %v213 = vld [vmem:[#allocation2 + $0x10] sm:$0xff]
    %v214 = vld [vmem:[#allocation2 + $0x18] sm:$0xff]
    %v215 = vld [vmem:[#allocation2 + $0x20] sm:$0xff]
    %v216 = vld [vmem:[#allocation2 + $0x28] sm:$0xff]
    %v217 = vld [vmem:[#allocation2 + $0x30] sm:$0xff]
    %v218 = vld [vmem:[#allocation2 + $0x38] sm:$0xff]
    %v219 = vld [vmem:[#allocation2 + $0x40] sm:$0xff]
    %v220 = vld [vmem:[#allocation2 + $0x48] sm:$0xff]
    %v221 = vld [vmem:[#allocation2 + $0x50] sm:$0xff]
    %v222 = vld [vmem:[#allocation2 + $0x58] sm:$0xff]
    %v223 = vld [vmem:[#allocation2 + $0x60] sm:$0xff]
    %v224 = vld [vmem:[#allocation2 + $0x68] sm:$0xff]
    %v225 = vld [vmem:[#allocation2 + $0x70] sm:$0xff]
    %v226 = vld [vmem:[#allocation2 + $0x78] sm:$0xff]
    %v227 = vld [vmem:[#allocation4] sm:$0xff]
    %v228 = vld [vmem:[#allocation4 + $0x8] sm:$0xff]
    %v229 = vld [vmem:[#allocation4 + $0x10] sm:$0xff]
    %v230 = vld [vmem:[#allocation4 + $0x18] sm:$0xff]
    %v231 = vld [vmem:[#allocation4 + $0x20] sm:$0xff]
    %v232 = vld [vmem:[#allocation4 + $0x28] sm:$0xff]
    %v233 = vld [vmem:[#allocation4 + $0x30] sm:$0xff]
    %v234 = vld [vmem:[#allocation4 + $0x38] sm:$0xff]
    %v235 = vld [vmem:[#allocation4 + $0x40] sm:$0xff]
    %v236 = vld [vmem:[#allocation4 + $0x48] sm:$0xff]
    %v237 = vld [vmem:[#allocation4 + $0x50] sm:$0xff]
    %v238 = vld [vmem:[#allocation4 + $0x58] sm:$0xff]
    %v239 = vld [vmem:[#allocation4 + $0x60] sm:$0xff]
    %v240 = vld [vmem:[#allocation4 + $0x68] sm:$0xff]
    %v241 = vld [vmem:[#allocation4 + $0x70] sm:$0xff]
    %v242 = vld [vmem:[#allocation4 + $0x78] sm:$0xff]
    %v259 = vunpack.c.l.b16 %v227
    %v260 = vunpack.c.h.b16 %v227
    %v261 = vunpack.c.l.b16 %v228
    %v262 = vunpack.c.h.b16 %v228
    %v263 = vunpack.c.l.b16 %v229
    %v264 = vunpack.c.h.b16 %v229
    %v265 = vunpack.c.l.b16 %v230
    %v266 = vunpack.c.h.b16 %v230
    %v267 = vunpack.c.l.b16 %v231
    %v268 = vunpack.c.h.b16 %v231
    %v269 = vunpack.c.l.b16 %v232
    %v270 = vunpack.c.h.b16 %v232
    %v271 = vunpack.c.l.b16 %v233
    %v272 = vunpack.c.h.b16 %v233
    %v273 = vunpack.c.l.b16 %v234
    %v274 = vunpack.c.h.b16 %v234
    %v275 = vunpack.c.l.b16 %v235
    %v276 = vunpack.c.h.b16 %v235
    %v277 = vunpack.c.l.b16 %v236
    %v278 = vunpack.c.h.b16 %v236
    %v279 = vunpack.c.l.b16 %v237
    %v280 = vunpack.c.h.b16 %v237
    %v281 = vunpack.c.l.b16 %v238
    %v282 = vunpack.c.h.b16 %v238
    %v283 = vunpack.c.l.b16 %v239
    %v284 = vunpack.c.h.b16 %v239
    %v285 = vunpack.c.l.b16 %v240
    %v286 = vunpack.c.h.b16 %v240
    %v287 = vunpack.c.l.b16 %v241
    %v288 = vunpack.c.h.b16 %v241
    %v289 = vunpack.c.l.b16 %v242
    %v290 = vunpack.c.h.b16 %v242
    %v291 = vpack.c.b16 %v261, %v259
    %v292 = vpack.c.b16 %v262, %v260
    %v293 = vpack.c.b16 %v265, %v263
    %v294 = vpack.c.b16 %v266, %v264
    %v295 = vpack.c.b16 %v269, %v267
    %v296 = vpack.c.b16 %v270, %v268
    %v297 = vpack.c.b16 %v273, %v271
    %v298 = vpack.c.b16 %v274, %v272
    %v299 = vpack.c.b16 %v277, %v275
    %v300 = vpack.c.b16 %v278, %v276
    %v301 = vpack.c.b16 %v281, %v279
    %v302 = vpack.c.b16 %v282, %v280
    %v303 = vpack.c.b16 %v285, %v283
    %v304 = vpack.c.b16 %v286, %v284
    %v305 = vpack.c.b16 %v289, %v287
    %v306 = vpack.c.b16 %v290, %v288
    %323 = vmatprep.subr.bf16.mxu0 %v292
    %324 = vmatpush1.bf16.msra.mxu0 %v291
    %325 = vmatprep.subr.bf16.mxu0 %v294
    %326 = vmatpush1.bf16.msra.mxu0 %v293
    %327 = vmatprep.subr.bf16.mxu0 %v296
    %328 = vmatpush1.bf16.msra.mxu0 %v295
    %329 = vmatprep.subr.bf16.mxu0 %v298
    %330 = vmatpush1.bf16.msra.mxu0 %v297
    %331 = vmatprep.subr.bf16.mxu0 %v300
    %332 = vmatpush1.bf16.msra.mxu0 %v299
    %333 = vmatprep.subr.bf16.mxu0 %v302
    %334 = vmatpush1.bf16.msra.mxu0 %v301
    %335 = vmatprep.subr.bf16.mxu0 %v304
    %336 = vmatpush1.bf16.msra.mxu0 %v303
    %337 = vmatprep.subr.bf16.mxu0 %v306
    %338 = vmatpush1.bf16.msra.mxu0 %v305
    %339 = vmatprep.subr.bf16.mxu0 0
    %340 = vmatpush1.bf16.msra.mxu0 0
    %341 = vmatprep.subr.bf16.mxu0 0
    %342 = vmatpush1.bf16.msra.mxu0 0
    %343 = vmatprep.subr.bf16.mxu0 0
    %344 = vmatpush1.bf16.msra.mxu0 0
    %345 = vmatprep.subr.bf16.mxu0 0
    %346 = vmatpush1.bf16.msra.mxu0 0
    %347 = vmatprep.subr.bf16.mxu0 0
    %348 = vmatpush1.bf16.msra.mxu0 0
    %349 = vmatprep.subr.bf16.mxu0 0
    %350 = vmatpush1.bf16.msra.mxu0 0
    %351 = vmatprep.subr.bf16.mxu0 0
    %352 = vmatpush1.bf16.msra.mxu0 0
    %353 = vmatprep.subr.bf16.mxu0 0
    %354 = vmatpush1.bf16.msra.mxu0 0
    %355 = vmatprep.mubr.bf16.mxu0 0
    %356 = vmatmul.mubr.bf16.gmra.mrb[0].mxu0 %v210
    %v357 = vpop.f32.mrb[0].mxu0
    %v358 = vadd.f32 0.0, %v357
    %v359 = vpop.f32.mrb[0].mxu0
    %v360 = vadd.f32 0.0, %v359
    %v361 = vpop.f32.mrb[0].mxu0
    %v362 = vpop.f32.mrb[0].mxu0
    %363 = vdwg.mxu0
    %v380 = vunpack.c.l.b16 %v211
    %v381 = vunpack.c.h.b16 %v211
    %v382 = vunpack.c.l.b16 %v212
    %v383 = vunpack.c.h.b16 %v212
    %v384 = vunpack.c.l.b16 %v213
    %v385 = vunpack.c.h.b16 %v213
    %v386 = vunpack.c.l.b16 %v214
    %v387 = vunpack.c.h.b16 %v214
    %v388 = vunpack.c.l.b16 %v215
    %v389 = vunpack.c.h.b16 %v215
    %v390 = vunpack.c.l.b16 %v216
    %v391 = vunpack.c.h.b16 %v216
    %v392 = vunpack.c.l.b16 %v217
    %v393 = vunpack.c.h.b16 %v217
    %v394 = vunpack.c.l.b16 %v218
    %v395 = vunpack.c.h.b16 %v218
    %v396 = vunpack.c.l.b16 %v219
    %v397 = vunpack.c.h.b16 %v219
    %v398 = vunpack.c.l.b16 %v220
    %v399 = vunpack.c.h.b16 %v220
    %v400 = vunpack.c.l.b16 %v221
    %v401 = vunpack.c.h.b16 %v221
    %v402 = vunpack.c.l.b16 %v222
    %v403 = vunpack.c.h.b16 %v222
    %v404 = vunpack.c.l.b16 %v223
    %v405 = vunpack.c.h.b16 %v223
    %v406 = vunpack.c.l.b16 %v224
    %v407 = vunpack.c.h.b16 %v224
    %v408 = vunpack.c.l.b16 %v225
    %v409 = vunpack.c.h.b16 %v225
    %v410 = vunpack.c.l.b16 %v226
    %v411 = vunpack.c.h.b16 %v226
    %v412 = vpack.c.b16 %v382, %v380
    %v413 = vpack.c.b16 %v383, %v381
    %v414 = vpack.c.b16 %v386, %v384
    %v415 = vpack.c.b16 %v387, %v385
    %v416 = vpack.c.b16 %v390, %v388
    %v417 = vpack.c.b16 %v391, %v389
    %v418 = vpack.c.b16 %v394, %v392
    %v419 = vpack.c.b16 %v395, %v393
    %v420 = vpack.c.b16 %v398, %v396
    %v421 = vpack.c.b16 %v399, %v397
    %v422 = vpack.c.b16 %v402, %v400
    %v423 = vpack.c.b16 %v403, %v401
    %v424 = vpack.c.b16 %v406, %v404
    %v425 = vpack.c.b16 %v407, %v405
    %v426 = vpack.c.b16 %v410, %v408
    %v427 = vpack.c.b16 %v411, %v409
    %444 = vmatprep.subr.bf16.mxu0 %v413
    %445 = vmatpush1.bf16.msra.mxu0 %v412
    %446 = vmatprep.subr.bf16.mxu0 %v415
    %447 = vmatpush1.bf16.msra.mxu0 %v414
    %448 = vmatprep.subr.bf16.mxu0 %v417
    %449 = vmatpush1.bf16.msra.mxu0 %v416
    %450 = vmatprep.subr.bf16.mxu0 %v419
    %451 = vmatpush1.bf16.msra.mxu0 %v418
    %452 = vmatprep.subr.bf16.mxu0 %v421
    %453 = vmatpush1.bf16.msra.mxu0 %v420
    %454 = vmatprep.subr.bf16.mxu0 %v423
    %455 = vmatpush1.bf16.msra.mxu0 %v422
    %456 = vmatprep.subr.bf16.mxu0 %v425
    %457 = vmatpush1.bf16.msra.mxu0 %v424
    %458 = vmatprep.subr.bf16.mxu0 %v427
    %459 = vmatpush1.bf16.msra.mxu0 %v426
    %460 = vmatprep.subr.bf16.mxu0 0
    %461 = vmatpush1.bf16.msra.mxu0 0
    %462 = vmatprep.subr.bf16.mxu0 0
    %463 = vmatpush1.bf16.msra.mxu0 0
    %464 = vmatprep.subr.bf16.mxu0 0
    %465 = vmatpush1.bf16.msra.mxu0 0
    %466 = vmatprep.subr.bf16.mxu0 0
    %467 = vmatpush1.bf16.msra.mxu0 0
    %468 = vmatprep.subr.bf16.mxu0 0
    %469 = vmatpush1.bf16.msra.mxu0 0
    %470 = vmatprep.subr.bf16.mxu0 0
    %471 = vmatpush1.bf16.msra.mxu0 0
    %472 = vmatprep.subr.bf16.mxu0 0
    %473 = vmatpush1.bf16.msra.mxu0 0
    %474 = vmatprep.subr.bf16.mxu0 0
    %475 = vmatpush1.bf16.msra.mxu0 0
    %476 = vmatprep.mubr.bf16.mxu0 0
    %477 = vmatmul.mubr.bf16.gmra.mrb[0].mxu0 %v209
    %v478 = vpop.f32.mrb[0].mxu0
    %v479 = vadd.f32 %v358, %v478
    %v480 = vpop.f32.mrb[0].mxu0
    %v481 = vadd.f32 %v360, %v480
    %v482 = vpop.f32.mrb[0].mxu0
    %v483 = vpop.f32.mrb[0].mxu0
    %484 = vdwg.mxu0
    %v485 = vld [vmem:[%s6] sm:$0x3]
    %v487 = vlaneseq
    %v488 = vshrl.u32 %v487, 7
    %v489 = vsub.s32 0, %v488
    %v490 = vrot.slane %v485, %v489
    %v491 = vlaneseq
    %v492 = vshrl.u32 %v491, 7
    %v493 = vsub.s32 1, %v492
    %v494 = vrot.slane %v485, %v493
    %v497 = vadd.f32 %v479, %v490
    %v498 = vadd.f32 %v481, %v494
    %v499 = vxor.u32 %v497, 2147483648
    %v500 = vmul.f32 %v499, 1.442695
    %v501 = vpow.pop %v500
    %v502 = vadd.f32 %v501, 1.0
    %v503 = vrcp.pop %v502
    %v504 = vmul.f32 1.0, %v503
    %v505 = vxor.u32 %v498, 2147483648
    %v506 = vmul.f32 %v505, 1.442695
    %v507 = vpow.pop %v506
    %v508 = vadd.f32 %v507, 1.0
    %v509 = vrcp.pop %v508
    %v510 = vmul.f32 1.0, %v509
    %v511 = vld [vmem:[#allocation6] sm:$0xf]
    %v512 = vld [vmem:[#allocation6 + $0x4] sm:$0xf]
    %v513 = vld [vmem:[#allocation6 + $0x8] sm:$0xf]
    %v514 = vld [vmem:[#allocation6 + $0xc] sm:$0xf]
    %v515 = vld [vmem:[#allocation6 + $0x10] sm:$0xf]
    %v516 = vld [vmem:[#allocation6 + $0x14] sm:$0xf]
    %v517 = vld [vmem:[#allocation6 + $0x18] sm:$0xf]
    %v518 = vld [vmem:[#allocation6 + $0x1c] sm:$0xf]
    %v519 = vld [vmem:[#allocation6 + $0x20] sm:$0xf]
    %v520 = vld [vmem:[#allocation6 + $0x24] sm:$0xf]
    %v521 = vld [vmem:[#allocation6 + $0x28] sm:$0xf]
    %v522 = vld [vmem:[#allocation6 + $0x2c] sm:$0xf]
    %v523 = vld [vmem:[#allocation6 + $0x30] sm:$0xf]
    %v524 = vld [vmem:[#allocation6 + $0x34] sm:$0xf]
    %v525 = vld [vmem:[#allocation6 + $0x38] sm:$0xf]
    %v526 = vld [vmem:[#allocation6 + $0x3c] sm:$0xf]
    %v527 = vld [vmem:[%s8] sm:$0x1]
    %v529 = vlaneseq
    %v530 = vshrl.u32 %v529, 7
    %v531 = vsub.s32 0, %v530
    %v532 = vrot.slane %v527, %v531
    %v550 = vunpack.c.l.b16 %v511
    %v551 = vunpack.c.l.b16 %v512
    %v552 = vunpack.c.l.b16 %v513
    %v553 = vunpack.c.l.b16 %v514
    %v554 = vunpack.c.l.b16 %v515
    %v555 = vunpack.c.l.b16 %v516
    %v556 = vunpack.c.l.b16 %v517
    %v557 = vunpack.c.l.b16 %v518
    %v558 = vunpack.c.l.b16 %v519
    %v559 = vunpack.c.l.b16 %v520
    %v560 = vunpack.c.l.b16 %v521
    %v561 = vunpack.c.l.b16 %v522
    %v562 = vunpack.c.l.b16 %v523
    %v563 = vunpack.c.l.b16 %v524
    %v564 = vunpack.c.l.b16 %v525
    %v565 = vunpack.c.l.b16 %v526
    %v566 = vpack.c.b16 %v551, %v550
    %v567 = vpack.c.b16 %v553, %v552
    %v568 = vpack.c.b16 %v555, %v554
    %v569 = vpack.c.b16 %v557, %v556
    %v570 = vpack.c.b16 %v559, %v558
    %v571 = vpack.c.b16 %v561, %v560
    %v572 = vpack.c.b16 %v563, %v562
    %v573 = vpack.c.b16 %v565, %v564
    %582 = vmatprep.subr.bf16.mxu0 0
    %583 = vmatpush1.bf16.msra.mxu0 %v566
    %584 = vmatprep.subr.bf16.mxu0 0
    %585 = vmatpush1.bf16.msra.mxu0 %v567
    %586 = vmatprep.subr.bf16.mxu0 0
    %587 = vmatpush1.bf16.msra.mxu0 %v568
    %588 = vmatprep.subr.bf16.mxu0 0
    %589 = vmatpush1.bf16.msra.mxu0 %v569
    %590 = vmatprep.subr.bf16.mxu0 0
    %591 = vmatpush1.bf16.msra.mxu0 %v570
    %592 = vmatprep.subr.bf16.mxu0 0
    %593 = vmatpush1.bf16.msra.mxu0 %v571
    %594 = vmatprep.subr.bf16.mxu0 0
    %595 = vmatpush1.bf16.msra.mxu0 %v572
    %596 = vmatprep.subr.bf16.mxu0 0
    %597 = vmatpush1.bf16.msra.mxu0 %v573
    %598 = vmatprep.subr.bf16.mxu0 0
    %599 = vmatpush1.bf16.msra.mxu0 0
    %600 = vmatprep.subr.bf16.mxu0 0
    %601 = vmatpush1.bf16.msra.mxu0 0
    %602 = vmatprep.subr.bf16.mxu0 0
    %603 = vmatpush1.bf16.msra.mxu0 0
    %604 = vmatprep.subr.bf16.mxu0 0
    %605 = vmatpush1.bf16.msra.mxu0 0
    %606 = vmatprep.subr.bf16.mxu0 0
    %607 = vmatpush1.bf16.msra.mxu0 0
    %608 = vmatprep.subr.bf16.mxu0 0
    %609 = vmatpush1.bf16.msra.mxu0 0
    %610 = vmatprep.subr.bf16.mxu0 0
    %611 = vmatpush1.bf16.msra.mxu0 0
    %612 = vmatprep.subr.bf16.mxu0 0
    %613 = vmatpush1.bf16.msra.mxu0 0
    %614 = vmatprep.mubr.bf16.mxu0 0
    %615 = vmatmul.mubr.bf16.gmra.mrb[0].mxu0 %v209
    %v616 = vpop.f32.mrb[0].mxu0
    %v617 = vadd.f32 %v532, %v616
    %v618 = vpop.f32.mrb[0].mxu0
    %v619 = vpop.f32.mrb[0].mxu0
    %v620 = vpop.f32.mrb[0].mxu0
    %621 = vdwg.mxu0
    %v622 = vld [vmem:[#allocation7] sm:$0xf]
    %v623 = vld [vmem:[#allocation7 + $0x4] sm:$0xf]
    %v624 = vld [vmem:[#allocation7 + $0x8] sm:$0xf]
    %v625 = vld [vmem:[#allocation7 + $0xc] sm:$0xf]
    %v626 = vld [vmem:[#allocation7 + $0x10] sm:$0xf]
    %v627 = vld [vmem:[#allocation7 + $0x14] sm:$0xf]
    %v628 = vld [vmem:[#allocation7 + $0x18] sm:$0xf]
    %v629 = vld [vmem:[#allocation7 + $0x1c] sm:$0xf]
    %v630 = vld [vmem:[#allocation7 + $0x20] sm:$0xf]
    %v631 = vld [vmem:[#allocation7 + $0x24] sm:$0xf]
    %v632 = vld [vmem:[#allocation7 + $0x28] sm:$0xf]
    %v633 = vld [vmem:[#allocation7 + $0x2c] sm:$0xf]
    %v634 = vld [vmem:[#allocation7 + $0x30] sm:$0xf]
    %v635 = vld [vmem:[#allocation7 + $0x34] sm:$0xf]
    %v636 = vld [vmem:[#allocation7 + $0x38] sm:$0xf]
    %v637 = vld [vmem:[#allocation7 + $0x3c] sm:$0xf]
    %v638 = vld [vmem:[%s10] sm:$0x1]
    %v640 = vlaneseq
    %v641 = vshrl.u32 %v640, 7
    %v642 = vsub.s32 0, %v641
    %v643 = vrot.slane %v638, %v642
    %v661 = vunpack.c.l.b16 %v622
    %v662 = vunpack.c.l.b16 %v623
    %v663 = vunpack.c.l.b16 %v624
    %v664 = vunpack.c.l.b16 %v625
    %v665 = vunpack.c.l.b16 %v626
    %v666 = vunpack.c.l.b16 %v627
    %v667 = vunpack.c.l.b16 %v628
    %v668 = vunpack.c.l.b16 %v629
    %v669 = vunpack.c.l.b16 %v630
    %v670 = vunpack.c.l.b16 %v631
    %v671 = vunpack.c.l.b16 %v632
    %v672 = vunpack.c.l.b16 %v633
    %v673 = vunpack.c.l.b16 %v634
    %v674 = vunpack.c.l.b16 %v635
    %v675 = vunpack.c.l.b16 %v636
    %v676 = vunpack.c.l.b16 %v637
    %v677 = vpack.c.b16 %v662, %v661
    %v678 = vpack.c.b16 %v664, %v663
    %v679 = vpack.c.b16 %v666, %v665
    %v680 = vpack.c.b16 %v668, %v667
    %v681 = vpack.c.b16 %v670, %v669
    %v682 = vpack.c.b16 %v672, %v671
    %v683 = vpack.c.b16 %v674, %v673
    %v684 = vpack.c.b16 %v676, %v675
    %693 = vmatprep.subr.bf16.mxu0 0
    %694 = vmatpush1.bf16.msra.mxu0 %v677
    %695 = vmatprep.subr.bf16.mxu0 0
    %696 = vmatpush1.bf16.msra.mxu0 %v678
    %697 = vmatprep.subr.bf16.mxu0 0
    %698 = vmatpush1.bf16.msra.mxu0 %v679
    %699 = vmatprep.subr.bf16.mxu0 0
    %700 = vmatpush1.bf16.msra.mxu0 %v680
    %701 = vmatprep.subr.bf16.mxu0 0
    %702 = vmatpush1.bf16.msra.mxu0 %v681
    %703 = vmatprep.subr.bf16.mxu0 0
    %704 = vmatpush1.bf16.msra.mxu0 %v682
    %705 = vmatprep.subr.bf16.mxu0 0
    %706 = vmatpush1.bf16.msra.mxu0 %v683
    %707 = vmatprep.subr.bf16.mxu0 0
    %708 = vmatpush1.bf16.msra.mxu0 %v684
    %709 = vmatprep.subr.bf16.mxu0 0
    %710 = vmatpush1.bf16.msra.mxu0 0
    %711 = vmatprep.subr.bf16.mxu0 0
    %712 = vmatpush1.bf16.msra.mxu0 0
    %713 = vmatprep.subr.bf16.mxu0 0
    %714 = vmatpush1.bf16.msra.mxu0 0
    %715 = vmatprep.subr.bf16.mxu0 0
    %716 = vmatpush1.bf16.msra.mxu0 0
    %717 = vmatprep.subr.bf16.mxu0 0
    %718 = vmatpush1.bf16.msra.mxu0 0
    %719 = vmatprep.subr.bf16.mxu0 0
    %720 = vmatpush1.bf16.msra.mxu0 0
    %721 = vmatprep.subr.bf16.mxu0 0
    %722 = vmatpush1.bf16.msra.mxu0 0
    %723 = vmatprep.subr.bf16.mxu0 0
    %724 = vmatpush1.bf16.msra.mxu0 0
    %725 = vmatprep.mubr.bf16.mxu0 0
    %726 = vmatmul.mubr.bf16.gmra.mrb[0].mxu0 %v210
    %v727 = vpop.f32.mrb[0].mxu0
    %v728 = vadd.f32 %v643, %v727
    %v729 = vpop.f32.mrb[0].mxu0
    %v730 = vpop.f32.mrb[0].mxu0
    %v731 = vpop.f32.mrb[0].mxu0
    %732 = vdwg.mxu0
    %v733 = vmul.f32 %v504, %v728
    %v734 = vadd.f32 %v617, %v733
    %v735 = vtanh.pop %v734
    %v736 = vsub.f32 %v95, %v735
    %v737 = vmul.f32 %v510, %v736
    %v738 = vadd.f32 %v735, %v737
    %739 = vst [vmem:[%s11] sm:$0xff] %v738
    // Predicated region
    $region62: #{rnn_msg_agent_forward.1} parent=1 // pred_check
      _
    $region63: #{rnn_msg_agent_forward.1} parent=1 // pred_check_branch
      %741 = sbr.rel (0) target = $region65
    $region64: #{rnn_msg_agent_forward.1} parent=1 // pred_region
      _
    $region65: #{rnn_msg_agent_forward.1} parent=1 // pred_fallthru
      _
    // Predicated region
    $region66: #{rnn_msg_agent_forward.1} parent=1 // pred_check
      _
    $region67: #{rnn_msg_agent_forward.1} parent=1 // pred_check_branch
      %743 = sbr.rel (0) target = $region69
    $region68: #{rnn_msg_agent_forward.1} parent=1 // pred_region
      _
    $region69: #{rnn_msg_agent_forward.1} parent=1 // pred_fallthru
      _
    %744 = vsyncpa [#allocation3], 1
    %745 = vsyncpa [#allocation5], 1
    %746 = vsyncpa [#allocation8], 1

</llo_original>
